<compile_context>
chip_gen: v7x
topology: tpu7x:2x2x1
jax: 0.10.0
libtpu: 0.0.40
codegen_flags: <defaults>
</compile_context>

<pallas_src>
import jax
import jax.numpy as jnp
from jax.experimental import pallas as pl
from jax.experimental.pallas import tpu as pltpu


def prefix_mlp_kernel(x_ref, w1_ref, w2_ref, o_ref):
    # x_ref : (P, D+1)   low_prefix with a trailing ones column
    # w1_ref: (D+1, B+1) [[w1, 0], [b1, 1]]
    # w2_ref: (B+1, tn)  current tile of [[w2], [b2]]
    # o_ref : (P, tn)
    h = jnp.dot(x_ref[...], w1_ref[...], preferred_element_type=jnp.float32)
    h = jnp.maximum(h, 0.0)  # ReLU; keeps the folded ones column == 1
    y = jnp.dot(h.astype(w2_ref.dtype), w2_ref[...],
                preferred_element_type=jnp.float32)
    o_ref[...] = y.astype(o_ref.dtype)


def _round_up(x, m):
    return ((x + m - 1) // m) * m


def prefix_mlp(low_prefix, w1, b1, w2, b2, *,
               param_dtype=None, tn_max=2048,
               vmem_budget_bytes=8 * 1024 * 1024):
    """out = ReLU(low_prefix @ w1 + b1) @ w2 + b2.

    low_prefix: (P, D); w1: (D, B); b1: (B,); w2: (B, O); b2: (O,).
    Weights are stored (in_features, out_features), i.e. pre-transposed vs torch.
    """
    P, D = low_prefix.shape
    B = w1.shape[1]
    O = w2.shape[1]
    out_dtype = low_prefix.dtype
    param_dtype = jnp.dtype(param_dtype if param_dtype is not None else w1.dtype)
    itemsize = param_dtype.itemsize
    out_itemsize = jnp.dtype(out_dtype).itemsize

    # ---- static-parameter prep: fold both biases into the matmuls ----
    x_aug = jnp.concatenate(
        [low_prefix, jnp.ones((P, 1), low_prefix.dtype)], axis=1)       # (P, D+1)
    w1_aug = jnp.zeros((D + 1, B + 1), w1.dtype)
    w1_aug = w1_aug.at[:D, :B].set(w1)
    w1_aug = w1_aug.at[D, :B].set(b1)
    w1_aug = w1_aug.at[D, B].set(1.0)                                   # (D+1, B+1)
    w2_aug = jnp.concatenate([w2, b2.reshape(1, O)], axis=0)            # (B+1, O)

    # ---- lane-dense output tile; pad O so every tile is full-width ----
    o128 = _round_up(O, 128)
    tn = min(tn_max, o128)
    # double-buffered (w2 tile + out tile) must fit the streaming VMEM budget
    per_lane = 2 * ((B + 1) * itemsize + P * out_itemsize)
    while tn > 128 and tn * per_lane > vmem_budget_bytes:
        tn -= 128
    o_pad = _round_up(O, tn)
    if o_pad != O:
        w2_aug = jnp.pad(w2_aug, ((0, 0), (0, o_pad - O)))

    x_aug = x_aug.astype(param_dtype)
    w1_aug = w1_aug.astype(param_dtype)
    w2_aug = w2_aug.astype(param_dtype)

    # Raise the scoped VMEM limit only when the working set exceeds the default.
    est = tn * per_lane + 2 * (P * (D + 1) + (D + 1) * (B + 1)) * itemsize
    vmem_limit = int(est * 1.5) if est > 24 * 1024 * 1024 else None

    n_tiles = pl.cdiv(o_pad, tn)
    out = pl.pallas_call(
        prefix_mlp_kernel,
        out_shape=jax.ShapeDtypeStruct((P, o_pad), out_dtype),
        grid=(n_tiles,),
        in_specs=[
            pl.BlockSpec((P, D + 1), lambda j: (0, 0)),      # resident
            pl.BlockSpec((D + 1, B + 1), lambda j: (0, 0)),  # resident
            pl.BlockSpec((B + 1, tn), lambda j: (0, j)),     # streamed over O
        ],
        out_specs=pl.BlockSpec((P, tn), lambda j: (0, j)),
        compiler_params=pltpu.CompilerParams(
            dimension_semantics=("parallel",),   # independent O-tiles -> megacore on v7x
            vmem_limit_bytes=vmem_limit,
        ),
    )(x_aug, w1_aug, w2_aug)
    return out[:, :O]


def reference_mlp(low_prefix, w1, b1, w2, b2):
    h = jnp.maximum(low_prefix @ w1 + b1, 0.0)
    return h @ w2 + b2


if __name__ == "__main__":
    # Small, module-consistent shapes.
    prefix_length = 8
    dim = 32
    layers = 2
    bottleneck = 16
    out_dim = dim * layers * 2  # 128

    key = jax.random.PRNGKey(0)
    k_prefix, k_w1, k_b1, k_w2, k_b2 = jax.random.split(key, 5)

    # Deterministic synthetic init (torch-like):
    low_prefix = jax.random.normal(k_prefix, (prefix_length, dim), jnp.float32)
    lim1 = 1.0 / jnp.sqrt(jnp.float32(dim))
    w1 = jax.random.uniform(k_w1, (dim, bottleneck), jnp.float32, -lim1, lim1)
    b1 = jax.random.uniform(k_b1, (bottleneck,), jnp.float32, -lim1, lim1)
    lim2 = 1.0 / jnp.sqrt(jnp.float32(bottleneck))
    w2 = jax.random.uniform(k_w2, (bottleneck, out_dim), jnp.float32, -lim2, lim2)
    b2 = jax.random.uniform(k_b2, (out_dim,), jnp.float32, -lim2, lim2)

    # PrefixMLP has no runtime input: its output is a pure function of the
    # parameters, so compute it once per parameter update and reuse the result
    # (review item #2). Here: one jitted call.
    prefix_mlp_cached = jax.jit(prefix_mlp)
    out = jax.block_until_ready(prefix_mlp_cached(low_prefix, w1, b1, w2, b2))

    ref = reference_mlp(low_prefix, w1, b1, w2, b2)
    assert out.shape == (prefix_length, out_dim), out.shape
    assert jnp.allclose(out, ref, atol=1e-5, rtol=1e-5), "mismatch vs reference"

    print("KERNEL_OK")
</pallas_src>

<mosaic_0001>
module attributes {stable_mosaic.version = 11 : i64} {
  func.func @prefix_mlp_kernel(%arg0: i32, %arg1: memref<8x33xf32, #tpu.memory_space<vmem>>, %arg2: memref<33x17xf32, #tpu.memory_space<vmem>>, %arg3: memref<17x128xf32, #tpu.memory_space<vmem>>, %arg4: memref<8x128xf32, #tpu.memory_space<vmem>>) attributes {dimension_semantics = [#tpu.dimension_semantics<parallel>], iteration_bounds = array<i64: 1>, scalar_prefetch = 0 : i64, scratch_operands = 0 : i64, tpu.core_type = #tpu.core_type<tc>, window_params = [{pipeline_mode = #tpu.pipeline_mode<synchronous>, transform_indices = @transform_0, window_bounds = array<i64: 8, 33>}, {pipeline_mode = #tpu.pipeline_mode<synchronous>, transform_indices = @transform_1, window_bounds = array<i64: 33, 17>}, {transform_indices = @transform_2, window_bounds = array<i64: 17, 128>}, {transform_indices = @transform_3, window_bounds = array<i64: 8, 128>}]} {
    %c0 = arith.constant 0 : index
    %c0_0 = arith.constant 0 : index
    %0 = vector.load %arg1[%c0, %c0_0] : memref<8x33xf32, #tpu.memory_space<vmem>>, vector<8x33xf32>
    %c0_1 = arith.constant 0 : index
    %c0_2 = arith.constant 0 : index
    %1 = vector.load %arg2[%c0_1, %c0_2] : memref<33x17xf32, #tpu.memory_space<vmem>>, vector<33x17xf32>
    %cst = arith.constant dense<0.000000e+00> : vector<8x17xf32>
    %2 = tpu.matmul %0, %1, %cst {dimension_numbers = #tpu.dot_dimension_numbers<[1], [0], [0], [1], [0, 0, 1, 1], [], []>} : vector<8x33xf32>, vector<33x17xf32>, vector<8x17xf32> -> vector<8x17xf32>
    %cst_3 = arith.constant 0.000000e+00 : f32
    %3 = vector.broadcast %cst_3 : f32 to vector<8x17xf32>
    %4 = arith.maximumf %2, %3 : vector<8x17xf32>
    %c0_4 = arith.constant 0 : index
    %c0_5 = arith.constant 0 : index
    %5 = vector.load %arg3[%c0_4, %c0_5] : memref<17x128xf32, #tpu.memory_space<vmem>>, vector<17x128xf32>
    %cst_6 = arith.constant dense<0.000000e+00> : vector<8x128xf32>
    %6 = tpu.matmul %4, %5, %cst_6 {dimension_numbers = #tpu.dot_dimension_numbers<[1], [0], [0], [1], [0, 0, 1, 1], [], []>} : vector<8x17xf32>, vector<17x128xf32>, vector<8x128xf32> -> vector<8x128xf32>
    %c0_7 = arith.constant 0 : index
    %c0_8 = arith.constant 0 : index
    %7 = vector.load %arg4[%c0_7, %c0_8] : memref<8x128xf32, #tpu.memory_space<vmem>>, vector<8x128xf32>
    tpu.vector_store %arg4[%c0_7, %c0_8], %6 {strides = array<i32>} : memref<8x128xf32, #tpu.memory_space<vmem>>, vector<8x128xf32>,
    return
  }
  func.func @transform_0(%arg0: i32) -> (i32, i32) {
    %c0_i32 = arith.constant 0 : i32
    %c0_i32_0 = arith.constant 0 : i32
    %c0_i32_1 = arith.constant 0 : i32
    return %c0_i32, %c0_i32_0 : i32, i32
  }
  func.func @transform_1(%arg0: i32) -> (i32, i32) {
    %c0_i32 = arith.constant 0 : i32
    %c0_i32_0 = arith.constant 0 : i32
    %c0_i32_1 = arith.constant 0 : i32
    return %c0_i32, %c0_i32_0 : i32, i32
  }
  func.func @transform_2(%arg0: i32) -> (i32, i32) {
    %c0_i32 = arith.constant 0 : i32
    %c0_i32_0 = arith.constant 0 : i32
    return %c0_i32, %arg0 : i32, i32
  }
  func.func @transform_3(%arg0: i32) -> (i32, i32) {
    %c0_i32 = arith.constant 0 : i32
    %c0_i32_0 = arith.constant 0 : i32
    return %c0_i32, %arg0 : i32, i32
  }
}

</mosaic_0001>

<llo_original>
// kernel: prefix_mlp.1
$region0: #{prefix_mlp.1}
  #allocation0 [shape = 'u32[]', space=smem, size = 0x4, offset = 0x4, fixed_abs, tag = 'smem constant byte address 0x4 - core index']
  #allocation1 [shape = 'u32[144,128]{1,0:T(1,128)}', space=vmem, size = 0x12000, scoped, tag = 'internal scratch']
  %s0 = inlined_call_operand.vmem [shape: f32[8,33], index: 0, kind: input, shape index: {}]
  %s1 = inlined_call_operand.vmem [shape: f32[33,17], index: 1, kind: input, shape index: {}]
  %s2 = inlined_call_operand.vmem [shape: f32[17,128], index: 2, kind: input, shape index: {}]
  %s3 = inlined_call_operand.hbm [shape: f32[8,128], index: 3, kind: output, shape index: {}]
  %s4 = sld [smem:[#allocation0]]
  $region22: #{prefix_mlp.1} parent=0
    _
  %s6 = ssub.s32 1, %s4
  %s7 = scalar_select 0, %s6, %s4
  $region1: #{prefix_mlp.1} parent=0
    #allocation2 [shape = 'u8[4096]{0}', space=vmem, size = 0x1000, scoped, tag = 'output window, operand 0, single buffered']
    #allocation3 [shape = 's32[1]{0}', space=sflag, size = 0x4, scoped, tag = 'scoped memory for prefix_mlp.1']
    %8 = vsyncpa [#allocation3], 0
    // Predicated region
    $region2: #{prefix_mlp.1} parent=1 // pred_check
      _
    $region3: #{prefix_mlp.1} parent=1 // pred_check_branch
      %10 = sbr.rel (0) target = $region5
    $region4: #{prefix_mlp.1} parent=1 // pred_region
      _
    $region5: #{prefix_mlp.1} parent=1 // pred_fallthru
      _
    // Predicated region
    $region6: #{prefix_mlp.1} parent=1 // pred_check
      _
    $region7: #{prefix_mlp.1} parent=1 // pred_check_branch
      %12 = sbr.rel (0) target = $region9
    $region8: #{prefix_mlp.1} parent=1 // pred_region
      _
    $region9: #{prefix_mlp.1} parent=1 // pred_fallthru
      _
    // Predicated region
    $region10: #{prefix_mlp.1} parent=1 // pred_check
      _
    $region11: #{prefix_mlp.1} parent=1 // pred_check_branch
      %14 = sbr.rel (0) target = $region13
    $region12: #{prefix_mlp.1} parent=1 // pred_region
      _
    $region13: #{prefix_mlp.1} parent=1 // pred_fallthru
      _
    %v15 = vld [vmem:[%s0] sm:$0xff]
    %v16 = vld [vmem:[%s1] sm:$0xff]
    %v17 = vld [vmem:[%s1 + $0x8] sm:$0xff]
    %v18 = vld [vmem:[%s1 + $0x10] sm:$0xff]
    %v19 = vld [vmem:[%s1 + $0x18] sm:$0xff]
    %v20 = vld [vmem:[%s1 + $0x20] sm:$0x1]
    %vm21 = vcmask 269312
    %v23 = vsel %vm21, %v15, 0
    %vm25 = vcmask 1040384
    %v27 = vsel %vm25, %v20, 0
    %29 = vmatprep.subr.mxu0 0.0
    %30 = vmatpush1.msra.mxu0 %v16
    %31 = vmatprep.subr.mxu0 0.0
    %32 = vmatpush1.msra.mxu0 %v17
    %33 = vmatprep.subr.mxu0 0.0
    %34 = vmatpush1.msra.mxu0 %v18
    %35 = vmatprep.subr.mxu0 0.0
    %36 = vmatpush1.msra.mxu0 %v19
    %37 = vmatprep.subr.mxu0 0.0
    %38 = vmatpush1.msra.mxu0 %v27
    %39 = vmatprep.subr.mxu0 0.0
    %40 = vmatpush1.msra.mxu0 0.0
    %41 = vmatprep.subr.mxu0 0.0
    %42 = vmatpush1.msra.mxu0 0.0
    %43 = vmatprep.subr.mxu0 0.0
    %44 = vmatpush1.msra.mxu0 0.0
    %45 = vmatprep.subr.mxu0 0.0
    %46 = vmatpush1.msra.mxu0 0.0
    %47 = vmatprep.subr.mxu0 0.0
    %48 = vmatpush1.msra.mxu0 0.0
    %49 = vmatprep.subr.mxu0 0.0
    %50 = vmatpush1.msra.mxu0 0.0
    %51 = vmatprep.subr.mxu0 0.0
    %52 = vmatpush1.msra.mxu0 0.0
    %53 = vmatprep.subr.mxu0 0.0
    %54 = vmatpush1.msra.mxu0 0.0
    %55 = vmatprep.subr.mxu0 0.0
    %56 = vmatpush1.msra.mxu0 0.0
    %57 = vmatprep.subr.mxu0 0.0
    %58 = vmatpush1.msra.mxu0 0.0
    %59 = vmatprep.subr.mxu0 0.0
    %60 = vmatpush1.msra.mxu0 0.0
    %61 = vmatprep.subr.mxu0 0.0
    %62 = vmatpush1.msra.mxu0 0.0
    %63 = vmatprep.subr.mxu0 0.0
    %64 = vmatpush1.msra.mxu0 0.0
    %65 = vmatprep.subr.mxu0 0.0
    %66 = vmatpush1.msra.mxu0 0.0
    %67 = vmatprep.subr.mxu0 0.0
    %68 = vmatpush1.msra.mxu0 0.0
    %69 = vmatprep.subr.mxu0 0.0
    %70 = vmatpush1.msra.mxu0 0.0
    %71 = vmatprep.subr.mxu0 0.0
    %72 = vmatpush1.msra.mxu0 0.0
    %73 = vmatprep.subr.mxu0 0.0
    %74 = vmatpush1.msra.mxu0 0.0
    %75 = vmatprep.subr.mxu0 0.0
    %76 = vmatpush1.msra.mxu0 0.0
    %77 = vmatprep.subr.mxu0 0.0
    %78 = vmatpush1.msra.mxu0 0.0
    %79 = vmatprep.subr.mxu0 0.0
    %80 = vmatpush1.msra.mxu0 0.0
    %81 = vmatprep.subr.mxu0 0.0
    %82 = vmatpush1.msra.mxu0 0.0
    %83 = vmatprep.subr.mxu0 0.0
    %84 = vmatpush1.msra.mxu0 0.0
    %85 = vmatprep.subr.mxu0 0.0
    %86 = vmatpush1.msra.mxu0 0.0
    %87 = vmatprep.subr.mxu0 0.0
    %88 = vmatpush1.msra.mxu0 0.0
    %89 = vmatprep.subr.mxu0 0.0
    %90 = vmatpush1.msra.mxu0 0.0
    %91 = vmatprep.subr.mxu0 0.0
    %92 = vmatpush1.msra.mxu0 0.0
    %93 = vmatprep.mubr.f32.mxu0 0.0
    %94 = vmatmul.mubr.f32.gmra.mrb[0].mxu0 %v23
    %v95 = vpop.f32.mrb[0].mxu0
    %v96 = vadd.f32 0.0, %v95
    %v97 = vpop.f32.mrb[0].mxu0
    %98 = vdwg.mxu0
    %v99 = vmax.f32 %v96, 0.0
    %v100 = vld [vmem:[%s2] sm:$0xff]
    %v101 = vld [vmem:[%s2 + $0x8] sm:$0xff]
    %v102 = vld [vmem:[%s2 + $0x10] sm:$0x1]
    %vm103 = vcmask 138240
    %v105 = vsel %vm103, %v99, 0
    %v108 = vsel %vm25, %v102, 0
    %110 = vmatprep.subr.mxu0 0.0
    %111 = vmatpush1.msra.mxu0 %v100
    %112 = vmatprep.subr.mxu0 0.0
    %113 = vmatpush1.msra.mxu0 %v101
    %114 = vmatprep.subr.mxu0 0.0
    %115 = vmatpush1.msra.mxu0 %v108
    %116 = vmatprep.subr.mxu0 0.0
    %117 = vmatpush1.msra.mxu0 0.0
    %118 = vmatprep.subr.mxu0 0.0
    %119 = vmatpush1.msra.mxu0 0.0
    %120 = vmatprep.subr.mxu0 0.0
    %121 = vmatpush1.msra.mxu0 0.0
    %122 = vmatprep.subr.mxu0 0.0
    %123 = vmatpush1.msra.mxu0 0.0
    %124 = vmatprep.subr.mxu0 0.0
    %125 = vmatpush1.msra.mxu0 0.0
    %126 = vmatprep.subr.mxu0 0.0
    %127 = vmatpush1.msra.mxu0 0.0
    %128 = vmatprep.subr.mxu0 0.0
    %129 = vmatpush1.msra.mxu0 0.0
    %130 = vmatprep.subr.mxu0 0.0
    %131 = vmatpush1.msra.mxu0 0.0
    %132 = vmatprep.subr.mxu0 0.0
    %133 = vmatpush1.msra.mxu0 0.0
    %134 = vmatprep.subr.mxu0 0.0
    %135 = vmatpush1.msra.mxu0 0.0
    %136 = vmatprep.subr.mxu0 0.0
    %137 = vmatpush1.msra.mxu0 0.0
    %138 = vmatprep.subr.mxu0 0.0
    %139 = vmatpush1.msra.mxu0 0.0
    %140 = vmatprep.subr.mxu0 0.0
    %141 = vmatpush1.msra.mxu0 0.0
    %142 = vmatprep.subr.mxu0 0.0
    %143 = vmatpush1.msra.mxu0 0.0
    %144 = vmatprep.subr.mxu0 0.0
    %145 = vmatpush1.msra.mxu0 0.0
    %146 = vmatprep.subr.mxu0 0.0
    %147 = vmatpush1.msra.mxu0 0.0
    %148 = vmatprep.subr.mxu0 0.0
    %149 = vmatpush1.msra.mxu0 0.0
    %150 = vmatprep.subr.mxu0 0.0
    %151 = vmatpush1.msra.mxu0 0.0
    %152 = vmatprep.subr.mxu0 0.0
    %153 = vmatpush1.msra.mxu0 0.0
    %154 = vmatprep.subr.mxu0 0.0
    %155 = vmatpush1.msra.mxu0 0.0
    %156 = vmatprep.subr.mxu0 0.0
    %157 = vmatpush1.msra.mxu0 0.0
    %158 = vmatprep.subr.mxu0 0.0
    %159 = vmatpush1.msra.mxu0 0.0
    %160 = vmatprep.subr.mxu0 0.0
    %161 = vmatpush1.msra.mxu0 0.0
    %162 = vmatprep.subr.mxu0 0.0
    %163 = vmatpush1.msra.mxu0 0.0
    %164 = vmatprep.subr.mxu0 0.0
    %165 = vmatpush1.msra.mxu0 0.0
    %166 = vmatprep.subr.mxu0 0.0
    %167 = vmatpush1.msra.mxu0 0.0
    %168 = vmatprep.subr.mxu0 0.0
    %169 = vmatpush1.msra.mxu0 0.0
    %170 = vmatprep.subr.mxu0 0.0
    %171 = vmatpush1.msra.mxu0 0.0
    %172 = vmatprep.subr.mxu0 0.0
    %173 = vmatpush1.msra.mxu0 0.0
    %174 = vmatprep.mubr.f32.mxu0 0.0
    %175 = vmatmul.mubr.f32.gmra.mrb[0].mxu0 %v105
    %v176 = vpop.f32.mrb[0].mxu0
    %v177 = vadd.f32 0.0, %v176
    %v178 = vpop.f32.mrb[0].mxu0
    %179 = vdwg.mxu0
    %180 = vst [vmem:[#allocation2] sm:$0xff] %v177
    // Predicated region
    $region14: #{prefix_mlp.1} parent=1 // pred_check
      _
    $region15: #{prefix_mlp.1} parent=1 // pred_check_branch
      %182 = sbr.rel (0) target = $region17
    $region16: #{prefix_mlp.1} parent=1 // pred_region
      %s184 = ssub.s32 128, 128
      %185 = vsyncadd [#allocation3], %s184
      %s187 = sshll.u32 [#allocation2], 4
      %s188 = int_to_ptr.vmem [resolvable:$true] %s187
      %190 = dma.vmem_to_hbm [thread:$0]  %s188, 128, %s3, [#allocation3]
    $region17: #{prefix_mlp.1} parent=1 // pred_fallthru
      _
    // Predicated region
    $region18: #{prefix_mlp.1} parent=1 // pred_check
      _
    $region19: #{prefix_mlp.1} parent=1 // pred_check_branch
      %192 = sbr.rel (0) target = $region21
    $region20: #{prefix_mlp.1} parent=1 // pred_region
      %193 = dma.done [#allocation3], 128
    $region21: #{prefix_mlp.1} parent=1 // pred_fallthru
      _
    %194 = vsyncpa [#allocation3], 1

</llo_original>
